<compile_context>
chip_gen: v6e
topology: v6e:2x2x1
jax: 0.10.0
libtpu: 0.0.40
codegen_flags: <defaults>
</compile_context>

<pallas_src>
import math
import functools

import jax
import jax.numpy as jnp
from jax.experimental import pallas as pl
from jax.experimental.pallas import tpu as pltpu


def _unit_gcn_kernel(x_ref, a_ref, w_ref, shift_ref, o_ref, *, num_ops, ttv, chunks):
    # x_ref:     (1, C, chunks*TtV)      bf16 activation slab (lane-dense, NCTV native)
    # a_ref:     (TtV, num_ops*TtV)      bf16 [kron(I,An_0)|...|kron(I,An_{K-1})|I]
    # w_ref:     (num_ops, Co, C)        bf16 folded conv/BN weights (last = down)
    # shift_ref: (Co, 1)                 f32  folded biases + BN shifts
    # o_ref:     (1, Co, chunks*TtV)     f32
    co = o_ref.shape[1]
    # Hoist the (Co,1)->(Co,TtV) broadcast out of the chunk loop.
    shift_b = jnp.broadcast_to(shift_ref[...], (co, ttv))

    for j in range(chunks):                      # static unroll; chunks <= 8
        xj = x_ref[0, :, pl.ds(j * ttv, ttv)]    # (C, TtV) bf16, 128-aligned lane slice
        # One fat vertex-mix matmul against all K adjacency ops + identity (down).
        xa = jnp.dot(xj, a_ref[...], preferred_element_type=jnp.float32)
        xa = xa.astype(jnp.bfloat16)             # (C, num_ops*TtV)
        # Channel mix: accumulate per-operator over static 128-aligned lane slices.
        y = shift_b
        for k in range(num_ops):
            y = y + jnp.dot(w_ref[k], xa[:, k * ttv:(k + 1) * ttv],
                            preferred_element_type=jnp.float32)
        o_ref[0, :, pl.ds(j * ttv, ttv)] = jnp.maximum(y, 0.0).astype(o_ref.dtype)


def _pick_t_tile(T, V, t_tile):
    """Smallest Tt dividing T with (Tt*V) % 128 == 0 (128 lanes is already
    full-width); fall back to Tt = T (block == full trailing dim) otherwise."""
    if t_tile is not None:
        assert T % t_tile == 0
        return t_tile
    for tt in range(1, T + 1):
        if T % tt == 0 and (tt * V) % 128 == 0:
            return tt
    return T


def unit_gcn_forward(x, A, W, b, bn_gamma, bn_beta, bn_mean, bn_var,
                     Wd, bd, dbn_gamma, dbn_beta, dbn_mean, dbn_var,
                     eps=1e-5, t_tile=None, max_chunks_per_step=8):
    """x: (N, C, T, V) float32 (PyTorch NCTV). Returns (N, Co, T, V) float32."""
    N, C, T, V = x.shape
    K, Co, _ = W.shape
    Tt = _pick_t_tile(T, V, t_tile)
    TtV = Tt * V
    num_ops = K + 1                               # K subsets + identity (down branch)

    # Explicit VMEM guard: the fallback tile (no 128-aligned Tt, e.g. V=25, T=64)
    # can make the wide adjacency operator huge; fail loudly instead of blowing
    # v7x's 64 MiB physical / 32 MiB default scoped VMEM at compile time.
    a_bytes = num_ops * TtV * TtV * 2             # bf16
    if a_bytes > (8 << 20):
        raise ValueError(
            f"wide adjacency operator needs {a_bytes / 2**20:.1f} MiB of VMEM "
            f"(TtV={TtV}); pass a smaller t_tile or pad V so Tt*V can hit a "
            f"multiple of 128")
    # TODO(synk): pad V up to a lane-friendly multiple (with zero adjacency
    # rows/cols) so graphs like V=25 also get a small 128-lane tile.

    n_chunks = T // Tt
    chunks = 1                                    # chunks of TtV lanes per grid step
    for c in range(1, min(n_chunks, max_chunks_per_step) + 1):
        if n_chunks % c == 0:
            chunks = c
    n_steps = n_chunks // chunks
    Lb = chunks * TtV                             # lanes per x/out block

    # ---- wrapper glue: all grid-invariant work hoisted out of the kernel ----
    # adjacency column L2 normalization: torch.norm(A, 2, dim=1, keepdim=True)+1e-4
    An = A / (jnp.sqrt(jnp.sum(A * A, axis=1, keepdims=True)) + 1e-4)   # (K, V, V)
    # block-diagonal operator kron(I_Tt, An[k]) keeps lanes = Tt*V throughout
    eye_t = jnp.eye(Tt, dtype=jnp.float32)
    a_kron = jnp.einsum('st,kvw->ksvtw', eye_t, An).reshape(K, TtV, TtV)
    a_ops = jnp.concatenate([a_kron, jnp.eye(TtV, dtype=jnp.float32)[None]], axis=0)
    a_wide = jnp.transpose(a_ops, (1, 0, 2)).reshape(TtV, num_ops * TtV)

    # fold eval-mode BatchNorms + conv biases into per-operator weights + one shift
    bn_scale = bn_gamma / jnp.sqrt(bn_var + eps)                        # (Co,)
    bn_shift = bn_beta - bn_mean * bn_scale
    dscale = dbn_gamma / jnp.sqrt(dbn_var + eps)
    Wd_eff = Wd * dscale[:, None]                                       # (Co, C)
    bd_eff = (bd - dbn_mean) * dscale + dbn_beta
    w_all = jnp.concatenate([W * bn_scale[None, :, None], Wd_eff[None]], axis=0)
    shift = (bn_scale * jnp.sum(b, axis=0) + bn_shift + bd_eff).reshape(Co, 1)

    # bf16 MXU operands (f32 accumulation stays inside the kernel); native NCTV
    # layout in/out via free trailing-dim merge/split.
    x16 = x.reshape(N, C, T * V).astype(jnp.bfloat16)
    a16 = a_wide.astype(jnp.bfloat16)
    w16 = w_all.astype(jnp.bfloat16)
    shift = shift.astype(jnp.float32)

    # explicit VMEM budget sized from the actual (double-buffered) blocks
    block_bytes = 2 * (C * Lb * 2 + Co * Lb * 4 + a_bytes
                       + num_ops * Co * C * 2 + Co * 4)
    vmem_limit = int(min(32 << 20, max(8 << 20, 4 * block_bytes)))

    kernel = functools.partial(_unit_gcn_kernel,
                               num_ops=num_ops, ttv=TtV, chunks=chunks)
    out_flat = pl.pallas_call(
        kernel,
        out_shape=jax.ShapeDtypeStruct((N, Co, T * V), jnp.float32),
        grid_spec=pltpu.PrefetchScalarGridSpec(
            num_scalar_prefetch=0,
            grid=(N, n_steps),
            in_specs=[
                pl.BlockSpec((1, C, Lb), lambda n, s: (n, 0, s)),          # x slab
                pl.BlockSpec((TtV, num_ops * TtV), lambda n, s: (0, 0)),   # adjacency (resident)
                pl.BlockSpec((num_ops, Co, C), lambda n, s: (0, 0, 0)),    # fused weights
                pl.BlockSpec((Co, 1), lambda n, s: (0, 0)),                # fused shift
            ],
            out_specs=pl.BlockSpec((1, Co, Lb), lambda n, s: (n, 0, s)),
        ),
        compiler_params=pltpu.CompilerParams(
            dimension_semantics=("parallel", "parallel"),
            vmem_limit_bytes=vmem_limit),
    )(x16, a16, w16, shift)

    return out_flat.reshape(N, Co, T, V)                                   # free split


def unit_gcn_reference(x, A, W, b, bn_gamma, bn_beta, bn_mean, bn_var,
                       Wd, bd, dg, dbeta, dm, dv, eps=1e-5):
    """Pure-JAX f32 reference mirroring the PyTorch forward (eval-mode BN)."""
    N, C, T, V = x.shape
    K, Co, _ = W.shape
    An = A / (jnp.linalg.norm(A, axis=1, keepdims=True) + 1e-4)
    y = jnp.zeros((N, Co, T, V), jnp.float32)
    for i in range(K):
        xa = jnp.matmul(x.reshape(N, C * T, V), An[i]).reshape(N, C, T, V)
        z = jnp.einsum('nctv,oc->notv', xa, W[i]) + b[i][None, :, None, None]
        y = y + z
    y = ((y - bn_mean[None, :, None, None]) / jnp.sqrt(bn_var[None, :, None, None] + eps)
         * bn_gamma[None, :, None, None] + bn_beta[None, :, None, None])
    down = jnp.einsum('nctv,oc->notv', x, Wd) + bd[None, :, None, None]
    down = ((down - dm[None, :, None, None]) / jnp.sqrt(dv[None, :, None, None] + eps)
            * dg[None, :, None, None] + dbeta[None, :, None, None])
    return jnp.maximum(y + down, 0.0)


if __name__ == "__main__":
    key = jax.random.PRNGKey(0)
    N, C_in, C_out, T, V, K = 2, 4, 8, 16, 16, 3
    ks = jax.random.split(key, 12)

    x = jax.random.normal(ks[0], (N, C_in, T, V), jnp.float32)

    # Adaptive adjacency PA (from A); num_subset = K.
    A = jax.random.normal(ks[1], (K, V, V), jnp.float32)

    # conv_d[i]: 1x1 Conv2d(C_in -> C_out) with conv_branch_init.
    W = jax.random.normal(ks[2], (K, C_out, C_in), jnp.float32) * math.sqrt(
        2.0 / (C_out * 1 * 1 * K))
    b = 0.1 * jax.random.normal(ks[3], (K, C_out), jnp.float32)

    # O(1) BN parameters + non-trivial running stats so the fused
    # adjacency/conv/BN path is numerically exercised by the check
    # (the module's bn_init(1e-6) would make that branch invisible).
    bn_gamma = 1.0 + 0.3 * jax.random.normal(ks[4], (C_out,), jnp.float32)
    bn_beta = 0.1 * jax.random.normal(ks[5], (C_out,), jnp.float32)
    bn_mean = 0.1 * jax.random.normal(ks[6], (C_out,), jnp.float32)
    bn_var = 1.0 + 0.2 * jax.random.uniform(ks[7], (C_out,), jnp.float32)

    # down branch (C_in != C_out): Conv2d 1x1 + BatchNorm.
    Wd = jax.random.normal(ks[8], (C_out, C_in), jnp.float32) * math.sqrt(2.0 / C_out)
    bd = 0.1 * jax.random.normal(ks[9], (C_out,), jnp.float32)
    dbn_gamma = 1.0 + 0.3 * jax.random.normal(ks[10], (C_out,), jnp.float32)
    dbn_beta = jnp.zeros((C_out,), jnp.float32)
    dbn_mean = 0.1 * jax.random.normal(ks[11], (C_out,), jnp.float32)
    dbn_var = 1.3 * jnp.ones((C_out,), jnp.float32)

    args = (x, A, W, b, bn_gamma, bn_beta, bn_mean, bn_var,
            Wd, bd, dbn_gamma, dbn_beta, dbn_mean, dbn_var)

    out = unit_gcn_forward(*args)
    out = jax.block_until_ready(out)

    ref = unit_gcn_reference(*args)
    assert out.shape == (N, C_out, T, V)
    max_err = float(jnp.max(jnp.abs(out - ref)))
    # bf16 MXU operands with f32 accumulation: compare at bf16-level tolerance.
    assert jnp.allclose(out, ref, atol=5e-2, rtol=5e-2), \
        f"mismatch vs reference (max abs err {max_err:.4f})"

    print("KERNEL_OK")
</pallas_src>

<mosaic_0001>
module attributes {stable_mosaic.version = 11 : i64} {
  func.func @_unit_gcn_kernel(%arg0: i32, %arg1: i32, %arg2: memref<1x4x256xbf16, #tpu.memory_space<vmem>>, %arg3: memref<128x512xbf16, #tpu.memory_space<vmem>>, %arg4: memref<4x8x4xbf16, #tpu.memory_space<vmem>>, %arg5: memref<8x1xf32, #tpu.memory_space<vmem>>, %arg6: memref<1x8x256xf32, #tpu.memory_space<vmem>>) attributes {dimension_semantics = [#tpu.dimension_semantics<parallel>, #tpu.dimension_semantics<parallel>], iteration_bounds = array<i64: 2, 1>, scalar_prefetch = 0 : i64, scratch_operands = 0 : i64, tpu.core_type = #tpu.core_type<tc>, window_params = [{transform_indices = @transform_0, window_bounds = array<i64: 1, 4, 256>}, {pipeline_mode = #tpu.pipeline_mode<synchronous>, transform_indices = @transform_1, window_bounds = array<i64: 128, 512>}, {pipeline_mode = #tpu.pipeline_mode<synchronous>, transform_indices = @transform_2, window_bounds = array<i64: 4, 8, 4>}, {pipeline_mode = #tpu.pipeline_mode<synchronous>, transform_indices = @transform_3, window_bounds = array<i64: 8, 1>}, {transform_indices = @transform_4, window_bounds = array<i64: 1, 8, 256>}]} {
    %c0 = arith.constant 0 : index
    %c0_0 = arith.constant 0 : index
    %0 = vector.load %arg5[%c0, %c0_0] : memref<8x1xf32, #tpu.memory_space<vmem>>, vector<8x1xf32>
    %1 = vector.shape_cast %0 : vector<8x1xf32> to vector<8x1xf32>
    %2 = vector.broadcast %1 : vector<8x1xf32> to vector<8x128xf32>
    %c0_1 = arith.constant 0 : index
    %c0_2 = arith.constant 0 : index
    %c0_3 = arith.constant 0 : index
    %3 = vector.load %arg2[%c0_1, %c0_2, %c0_3] : memref<1x4x256xbf16, #tpu.memory_space<vmem>>, vector<1x4x128xbf16>
    %4 = vector.shape_cast %3 : vector<1x4x128xbf16> to vector<4x128xbf16>
    %c0_4 = arith.constant 0 : index
    %c0_5 = arith.constant 0 : index
    %5 = vector.load %arg3[%c0_4, %c0_5] : memref<128x512xbf16, #tpu.memory_space<vmem>>, vector<128x512xbf16>
    %cst = arith.constant dense<0.000000e+00> : vector<4x512xf32>
    %6 = tpu.matmul %4, %5, %cst {dimension_numbers = #tpu.dot_dimension_numbers<[1], [0], [0], [1], [0, 0, 1, 1], [], []>} : vector<4x128xbf16>, vector<128x512xbf16>, vector<4x512xf32> -> vector<4x512xf32>
    %7 = arith.truncf %6 : vector<4x512xf32> to vector<4x512xbf16>
    %c0_6 = arith.constant 0 : index
    %c0_7 = arith.constant 0 : index
    %c0_8 = arith.constant 0 : index
    %8 = vector.load %arg4[%c0_6, %c0_7, %c0_8] : memref<4x8x4xbf16, #tpu.memory_space<vmem>>, vector<1x8x4xbf16>
    %9 = vector.shape_cast %8 : vector<1x8x4xbf16> to vector<8x4xbf16>
    %10 = vector.extract_strided_slice %7 {offsets = [0, 0], sizes = [4, 128], strides = [1, 1]} : vector<4x512xbf16> to vector<4x128xbf16>
    %cst_9 = arith.constant dense<0.000000e+00> : vector<8x128xf32>
    %11 = tpu.matmul %9, %10, %cst_9 {dimension_numbers = #tpu.dot_dimension_numbers<[1], [0], [0], [1], [0, 0, 1, 1], [], []>} : vector<8x4xbf16>, vector<4x128xbf16>, vector<8x128xf32> -> vector<8x128xf32>
    %12 = arith.addf %2, %11 : vector<8x128xf32>
    %c1 = arith.constant 1 : index
    %c0_10 = arith.constant 0 : index
    %c0_11 = arith.constant 0 : index
    %13 = vector.load %arg4[%c1, %c0_10, %c0_11] : memref<4x8x4xbf16, #tpu.memory_space<vmem>>, vector<1x8x4xbf16>
    %14 = vector.shape_cast %13 : vector<1x8x4xbf16> to vector<8x4xbf16>
    %15 = vector.extract_strided_slice %7 {offsets = [0, 128], sizes = [4, 128], strides = [1, 1]} : vector<4x512xbf16> to vector<4x128xbf16>
    %cst_12 = arith.constant dense<0.000000e+00> : vector<8x128xf32>
    %16 = tpu.matmul %14, %15, %cst_12 {dimension_numbers = #tpu.dot_dimension_numbers<[1], [0], [0], [1], [0, 0, 1, 1], [], []>} : vector<8x4xbf16>, vector<4x128xbf16>, vector<8x128xf32> -> vector<8x128xf32>
    %17 = arith.addf %12, %16 : vector<8x128xf32>
    %c2 = arith.constant 2 : index
    %c0_13 = arith.constant 0 : index
    %c0_14 = arith.constant 0 : index
    %18 = vector.load %arg4[%c2, %c0_13, %c0_14] : memref<4x8x4xbf16, #tpu.memory_space<vmem>>, vector<1x8x4xbf16>
    %19 = vector.shape_cast %18 : vector<1x8x4xbf16> to vector<8x4xbf16>
    %20 = vector.extract_strided_slice %7 {offsets = [0, 256], sizes = [4, 128], strides = [1, 1]} : vector<4x512xbf16> to vector<4x128xbf16>
    %cst_15 = arith.constant dense<0.000000e+00> : vector<8x128xf32>
    %21 = tpu.matmul %19, %20, %cst_15 {dimension_numbers = #tpu.dot_dimension_numbers<[1], [0], [0], [1], [0, 0, 1, 1], [], []>} : vector<8x4xbf16>, vector<4x128xbf16>, vector<8x128xf32> -> vector<8x128xf32>
    %22 = arith.addf %17, %21 : vector<8x128xf32>
    %c3 = arith.constant 3 : index
    %c0_16 = arith.constant 0 : index
    %c0_17 = arith.constant 0 : index
    %23 = vector.load %arg4[%c3, %c0_16, %c0_17] : memref<4x8x4xbf16, #tpu.memory_space<vmem>>, vector<1x8x4xbf16>
    %24 = vector.shape_cast %23 : vector<1x8x4xbf16> to vector<8x4xbf16>
    %25 = vector.extract_strided_slice %7 {offsets = [0, 384], sizes = [4, 128], strides = [1, 1]} : vector<4x512xbf16> to vector<4x128xbf16>
    %cst_18 = arith.constant dense<0.000000e+00> : vector<8x128xf32>
    %26 = tpu.matmul %24, %25, %cst_18 {dimension_numbers = #tpu.dot_dimension_numbers<[1], [0], [0], [1], [0, 0, 1, 1], [], []>} : vector<8x4xbf16>, vector<4x128xbf16>, vector<8x128xf32> -> vector<8x128xf32>
    %27 = arith.addf %22, %26 : vector<8x128xf32>
    %cst_19 = arith.constant 0.000000e+00 : f32
    %28 = vector.broadcast %cst_19 : f32 to vector<8x128xf32>
    %29 = arith.maximumf %27, %28 : vector<8x128xf32>
    %c0_20 = arith.constant 0 : index
    %c0_21 = arith.constant 0 : index
    %c0_22 = arith.constant 0 : index
    %30 = vector.load %arg6[%c0_20, %c0_21, %c0_22] : memref<1x8x256xf32, #tpu.memory_space<vmem>>, vector<1x8x128xf32>
    %31 = vector.shape_cast %30 : vector<1x8x128xf32> to vector<8x128xf32>
    %32 = vector.shape_cast %29 : vector<8x128xf32> to vector<1x8x128xf32>
    tpu.vector_store %arg6[%c0_20, %c0_21, %c0_22], %32 {strides = array<i32>} : memref<1x8x256xf32, #tpu.memory_space<vmem>>, vector<1x8x128xf32>,
    %c0_23 = arith.constant 0 : index
    %c0_24 = arith.constant 0 : index
    %c128 = arith.constant 128 : index
    %33 = vector.load %arg2[%c0_23, %c0_24, %c128] : memref<1x4x256xbf16, #tpu.memory_space<vmem>>, vector<1x4x128xbf16>
    %34 = vector.shape_cast %33 : vector<1x4x128xbf16> to vector<4x128xbf16>
    %c0_25 = arith.constant 0 : index
    %c0_26 = arith.constant 0 : index
    %35 = vector.load %arg3[%c0_25, %c0_26] : memref<128x512xbf16, #tpu.memory_space<vmem>>, vector<128x512xbf16>
    %cst_27 = arith.constant dense<0.000000e+00> : vector<4x512xf32>
    %36 = tpu.matmul %34, %35, %cst_27 {dimension_numbers = #tpu.dot_dimension_numbers<[1], [0], [0], [1], [0, 0, 1, 1], [], []>} : vector<4x128xbf16>, vector<128x512xbf16>, vector<4x512xf32> -> vector<4x512xf32>
    %37 = arith.truncf %36 : vector<4x512xf32> to vector<4x512xbf16>
    %c0_28 = arith.constant 0 : index
    %c0_29 = arith.constant 0 : index
    %c0_30 = arith.constant 0 : index
    %38 = vector.load %arg4[%c0_28, %c0_29, %c0_30] : memref<4x8x4xbf16, #tpu.memory_space<vmem>>, vector<1x8x4xbf16>
    %39 = vector.shape_cast %38 : vector<1x8x4xbf16> to vector<8x4xbf16>
    %40 = vector.extract_strided_slice %37 {offsets = [0, 0], sizes = [4, 128], strides = [1, 1]} : vector<4x512xbf16> to vector<4x128xbf16>
    %cst_31 = arith.constant dense<0.000000e+00> : vector<8x128xf32>
    %41 = tpu.matmul %39, %40, %cst_31 {dimension_numbers = #tpu.dot_dimension_numbers<[1], [0], [0], [1], [0, 0, 1, 1], [], []>} : vector<8x4xbf16>, vector<4x128xbf16>, vector<8x128xf32> -> vector<8x128xf32>
    %42 = arith.addf %2, %41 : vector<8x128xf32>
    %c1_32 = arith.constant 1 : index
    %c0_33 = arith.constant 0 : index
    %c0_34 = arith.constant 0 : index
    %43 = vector.load %arg4[%c1_32, %c0_33, %c0_34] : memref<4x8x4xbf16, #tpu.memory_space<vmem>>, vector<1x8x4xbf16>
    %44 = vector.shape_cast %43 : vector<1x8x4xbf16> to vector<8x4xbf16>
    %45 = vector.extract_strided_slice %37 {offsets = [0, 128], sizes = [4, 128], strides = [1, 1]} : vector<4x512xbf16> to vector<4x128xbf16>
    %cst_35 = arith.constant dense<0.000000e+00> : vector<8x128xf32>
    %46 = tpu.matmul %44, %45, %cst_35 {dimension_numbers = #tpu.dot_dimension_numbers<[1], [0], [0], [1], [0, 0, 1, 1], [], []>} : vector<8x4xbf16>, vector<4x128xbf16>, vector<8x128xf32> -> vector<8x128xf32>
    %47 = arith.addf %42, %46 : vector<8x128xf32>
    %c2_36 = arith.constant 2 : index
    %c0_37 = arith.constant 0 : index
    %c0_38 = arith.constant 0 : index
    %48 = vector.load %arg4[%c2_36, %c0_37, %c0_38] : memref<4x8x4xbf16, #tpu.memory_space<vmem>>, vector<1x8x4xbf16>
    %49 = vector.shape_cast %48 : vector<1x8x4xbf16> to vector<8x4xbf16>
    %50 = vector.extract_strided_slice %37 {offsets = [0, 256], sizes = [4, 128], strides = [1, 1]} : vector<4x512xbf16> to vector<4x128xbf16>
    %cst_39 = arith.constant dense<0.000000e+00> : vector<8x128xf32>
    %51 = tpu.matmul %49, %50, %cst_39 {dimension_numbers = #tpu.dot_dimension_numbers<[1], [0], [0], [1], [0, 0, 1, 1], [], []>} : vector<8x4xbf16>, vector<4x128xbf16>, vector<8x128xf32> -> vector<8x128xf32>
    %52 = arith.addf %47, %51 : vector<8x128xf32>
    %c3_40 = arith.constant 3 : index
    %c0_41 = arith.constant 0 : index
    %c0_42 = arith.constant 0 : index
    %53 = vector.load %arg4[%c3_40, %c0_41, %c0_42] : memref<4x8x4xbf16, #tpu.memory_space<vmem>>, vector<1x8x4xbf16>
    %54 = vector.shape_cast %53 : vector<1x8x4xbf16> to vector<8x4xbf16>
    %55 = vector.extract_strided_slice %37 {offsets = [0, 384], sizes = [4, 128], strides = [1, 1]} : vector<4x512xbf16> to vector<4x128xbf16>
    %cst_43 = arith.constant dense<0.000000e+00> : vector<8x128xf32>
    %56 = tpu.matmul %54, %55, %cst_43 {dimension_numbers = #tpu.dot_dimension_numbers<[1], [0], [0], [1], [0, 0, 1, 1], [], []>} : vector<8x4xbf16>, vector<4x128xbf16>, vector<8x128xf32> -> vector<8x128xf32>
    %57 = arith.addf %52, %56 : vector<8x128xf32>
    %cst_44 = arith.constant 0.000000e+00 : f32
    %58 = vector.broadcast %cst_44 : f32 to vector<8x128xf32>
    %59 = arith.maximumf %57, %58 : vector<8x128xf32>
    %c0_45 = arith.constant 0 : index
    %c0_46 = arith.constant 0 : index
    %c128_47 = arith.constant 128 : index
    %60 = vector.load %arg6[%c0_45, %c0_46, %c128_47] : memref<1x8x256xf32, #tpu.memory_space<vmem>>, vector<1x8x128xf32>
    %61 = vector.shape_cast %60 : vector<1x8x128xf32> to vector<8x128xf32>
    %62 = vector.shape_cast %59 : vector<8x128xf32> to vector<1x8x128xf32>
    tpu.vector_store %arg6[%c0_45, %c0_46, %c128_47], %62 {strides = array<i32>} : memref<1x8x256xf32, #tpu.memory_space<vmem>>, vector<1x8x128xf32>,
    return
  }
  func.func @transform_0(%arg0: i32, %arg1: i32) -> (i32, i32, i32) {
    %c0_i32 = arith.constant 0 : i32
    %c0_i32_0 = arith.constant 0 : i32
    return %arg0, %c0_i32, %arg1 : i32, i32, i32
  }
  func.func @transform_1(%arg0: i32, %arg1: i32) -> (i32, i32) {
    %c0_i32 = arith.constant 0 : i32
    %c0_i32_0 = arith.constant 0 : i32
    %c0_i32_1 = arith.constant 0 : i32
    return %c0_i32, %c0_i32_0 : i32, i32
  }
  func.func @transform_2(%arg0: i32, %arg1: i32) -> (i32, i32, i32) {
    %c0_i32 = arith.constant 0 : i32
    %c0_i32_0 = arith.constant 0 : i32
    %c0_i32_1 = arith.constant 0 : i32
    %c0_i32_2 = arith.constant 0 : i32
    return %c0_i32, %c0_i32_0, %c0_i32_1 : i32, i32, i32
  }
  func.func @transform_3(%arg0: i32, %arg1: i32) -> (i32, i32) {
    %c0_i32 = arith.constant 0 : i32
    %c0_i32_0 = arith.constant 0 : i32
    %c0_i32_1 = arith.constant 0 : i32
    return %c0_i32, %c0_i32_0 : i32, i32
  }
  func.func @transform_4(%arg0: i32, %arg1: i32) -> (i32, i32, i32) {
    %c0_i32 = arith.constant 0 : i32
    %c0_i32_0 = arith.constant 0 : i32
    return %arg0, %c0_i32, %arg1 : i32, i32, i32
  }
}

</mosaic_0001>

<llo_original>
// kernel: tpu_custom_call.1
$region0: #{tpu_custom_call.1}
  #allocation0 [shape = 'u32[]', space=smem, size = 0x4, offset = 0x4, fixed_abs, tag = 'smem constant byte address 0x4 - core index']
  #allocation1 [shape = 'u32[144,128]{1,0:T(1,128)}', space=vmem, size = 0x12000, scoped, tag = 'internal scratch']
  %s0 = inlined_call_operand.vmem [shape: bf16[2,4,256], index: 0, kind: input, shape index: {}]
  %s1 = inlined_call_operand.hbm [shape: bf16[128,512], index: 1, kind: input, shape index: {}]
  %s2 = inlined_call_operand.vmem [shape: bf16[4,8,4], index: 2, kind: input, shape index: {}]
  %s3 = inlined_call_operand.vmem [shape: f32[8,1], index: 3, kind: input, shape index: {}]
  %s4 = inlined_call_operand.hbm [shape: f32[2,8,256], index: 4, kind: output, shape index: {}]
  %s5 = sld [smem:[#allocation0]]
  $region53: #{tpu_custom_call.1} parent=0
    _
  %s7 = ssub.s32 1, %s5
  %s8 = scalar_select 0, %s7, %s5
  $region1: #{tpu_custom_call.1} parent=0
    #allocation2 [shape = 'u8[131072]{0}', space=vmem, size = 0x20000, scoped, tag = 'input window, operand 1, single buffered']
    #allocation3 [shape = 's32[2]{0}', space=sflag, size = 0x8, scoped, tag = 'scoped memory for tpu_custom_call.1']
    #allocation4 [shape = 's32[2]{0}', space=sflag, size = 0x8, scoped, tag = 'scoped memory for tpu_custom_call.1']
    #allocation5 [shape = 'u8[16384]{0}', space=vmem, size = 0x4000, scoped, tag = 'output window, operand 0']
    %9 = vsyncpa [#allocation3], 0
    %10 = vsyncpa [#allocation4], 0
    %s11 = scalar_lea.sflag [#allocation4], 1
    %12 = vsyncpa %s11, 0
    loop: start=0, step=1, limit=4
    $region2: #{tpu_custom_call.1} parent=1 // loop_pre_header
      _
    $region3: #{tpu_custom_call.1} parent=1 // loop_header
      %s14 = sphi 0, %s18
      %p15 = scmp.ge.s32.totalorder %s14, 4
      %s21 = sphi 0, %s33
      %s22 = sphi 0, %s29
      %s23 = sphi 0, %s21
      %s24 = sphi 0, %s22
      %s25 = sphi 0, %s23
      %s26 = sphi 0, %s24
      %s38 = sphi 0, %s40
      %s41 = sphi 0, %s38
      %s42 = sphi 0, %s41
      %s58 = sphi 0, %s42
      %s62 = sphi 0, %s62
      %s64 = sphi 0, %s62
      %s65 = sphi 0, %s64
      %s79 = sphi 0, %s65
      %s83 = sphi 0, %s83
      %s85 = sphi 0, %s83
      %s86 = sphi 0, %s85
      %s100 = sphi 0, %s86
      %s104 = sphi 0, %s104
      %s106 = sphi 0, %s104
      %s107 = sphi 0, %s106
      %s121 = sphi 0, %s107
      %s129 = sphi 0, %s131
      %s132 = sphi 0, %s129
      %s133 = sphi 0, %s132
      %s149 = sphi 0, %s133
    $region4: #{tpu_custom_call.1} parent=1 // loop_header_branch
      %17 = sbr.rel (%p15) target = $region8
    $region5: #{tpu_custom_call.1} parent=1 // loop_body
      %s19 = ssub.s32 %s14, 1
      %s20 = ssub.s32 %s14, 2
      %s27 = sadd.s32 1, %s22
      %p28 = scmp.ge.s32.totalorder %s27, 1
      %s29 = scalar_select %p28, 0, %s27
      %s30 = sadd.s32 1, %s21
      %s31 = scalar_select %p28, %s30, %s21
      %p32 = scmp.ge.s32.totalorder %s31, 2
      %s33 = scalar_select %p32, 0, %s31
      %s34 = ssub.s32 %s21, %s33
      %s35 = ssub.s32 %s22, %s29
      %s36 = sor.u32 %s34, %s35
      %p37 = scmp.eq.s32.totalorder %s36, 0
      %s39 = sadd.s32 %s38, 1
      %s40 = scalar_select %p37, %s38, %s39
      %p43 = pneg %p37
      %p44 = scmp.eq.s32.totalorder %s14, 1
      %p45 = por %p43, %p44
      %p46 = scmp.ne.s32.totalorder %s38, %s41
      %p47 = scmp.eq.s32.totalorder %s14, 0
      %p48 = por %p46, %p47
      %p49 = scmp.ne.s32.totalorder %s38, %s41
      %p50 = scmp.eq.s32.totalorder %s19, 1
      %p51 = por %p49, %p50
      %p52 = scmp.ne.s32.totalorder %s41, %s42
      %p53 = scmp.eq.s32.totalorder %s19, 0
      %p54 = por %p52, %p53
      %p55 = scmp.ne.s32.totalorder %s41, %s42
      %p56 = scmp.eq.s32.totalorder %s20, 1
      %p57 = por %p55, %p56
      %p59 = scmp.ne.s32.totalorder %s42, %s58
      %p60 = scmp.eq.s32.totalorder %s20, 0
      %p61 = por %p59, %p60
      %s63 = sadd.s32 %s62, 1
      %p66 = scmp.eq.s32.totalorder %s14, 1
      %p67 = scmp.ne.s32.totalorder %s62, %s64
      %p68 = scmp.eq.s32.totalorder %s14, 0
      %p69 = por %p67, %p68
      %p70 = scmp.ne.s32.totalorder %s62, %s64
      %p71 = scmp.eq.s32.totalorder %s19, 1
      %p72 = por %p70, %p71
      %p73 = scmp.ne.s32.totalorder %s64, %s65
      %p74 = scmp.eq.s32.totalorder %s19, 0
      %p75 = por %p73, %p74
      %p76 = scmp.ne.s32.totalorder %s64, %s65
      %p77 = scmp.eq.s32.totalorder %s20, 1
      %p78 = por %p76, %p77
      %p80 = scmp.ne.s32.totalorder %s65, %s79
      %p81 = scmp.eq.s32.totalorder %s20, 0
      %p82 = por %p80, %p81
      %s84 = sadd.s32 %s83, 1
      %p87 = scmp.eq.s32.totalorder %s14, 1
      %p88 = scmp.ne.s32.totalorder %s83, %s85
      %p89 = scmp.eq.s32.totalorder %s14, 0
      %p90 = por %p88, %p89
      %p91 = scmp.ne.s32.totalorder %s83, %s85
      %p92 = scmp.eq.s32.totalorder %s19, 1
      %p93 = por %p91, %p92
      %p94 = scmp.ne.s32.totalorder %s85, %s86
      %p95 = scmp.eq.s32.totalorder %s19, 0
      %p96 = por %p94, %p95
      %p97 = scmp.ne.s32.totalorder %s85, %s86
      %p98 = scmp.eq.s32.totalorder %s20, 1
      %p99 = por %p97, %p98
      %p101 = scmp.ne.s32.totalorder %s86, %s100
      %p102 = scmp.eq.s32.totalorder %s20, 0
      %p103 = por %p101, %p102
      %s105 = sadd.s32 %s104, 1
      %p108 = scmp.eq.s32.totalorder %s14, 1
      %p109 = scmp.ne.s32.totalorder %s104, %s106
      %p110 = scmp.eq.s32.totalorder %s14, 0
      %p111 = por %p109, %p110
      %p112 = scmp.ne.s32.totalorder %s104, %s106
      %p113 = scmp.eq.s32.totalorder %s19, 1
      %p114 = por %p112, %p113
      %p115 = scmp.ne.s32.totalorder %s106, %s107
      %p116 = scmp.eq.s32.totalorder %s19, 0
      %p117 = por %p115, %p116
      %p118 = scmp.ne.s32.totalorder %s106, %s107
      %p119 = scmp.eq.s32.totalorder %s20, 1
      %p120 = por %p118, %p119
      %p122 = scmp.ne.s32.totalorder %s107, %s121
      %p123 = scmp.eq.s32.totalorder %s20, 0
      %p124 = por %p122, %p123
      %s125 = ssub.s32 %s21, %s33
      %s126 = ssub.s32 %s22, %s29
      %s127 = sor.u32 %s125, %s126
      %p128 = scmp.eq.s32.totalorder %s127, 0
      %s130 = sadd.s32 %s129, 1
      %s131 = scalar_select %p128, %s129, %s130
      %p134 = pneg %p128
      %p135 = scmp.eq.s32.totalorder %s14, 1
      %p136 = por %p134, %p135
      %p137 = scmp.ne.s32.totalorder %s129, %s132
      %p138 = scmp.eq.s32.totalorder %s14, 0
      %p139 = por %p137, %p138
      %p140 = scmp.ne.s32.totalorder %s129, %s132
      %p141 = scmp.eq.s32.totalorder %s19, 1
      %p142 = por %p140, %p141
      %p143 = scmp.ne.s32.totalorder %s132, %s133
      %p144 = scmp.eq.s32.totalorder %s19, 0
      %p145 = por %p143, %p144
      %p146 = scmp.ne.s32.totalorder %s132, %s133
      %p147 = scmp.eq.s32.totalorder %s20, 1
      %p148 = por %p146, %p147
      %p150 = scmp.ne.s32.totalorder %s133, %s149
      %p151 = scmp.eq.s32.totalorder %s20, 0
      %p152 = por %p150, %p151
      %p153 = scmp.le.s32.totalorder 1, %s14
      %p154 = scmp.lt.s32.totalorder %s14, 3
      %p155 = pnand %p153, %p154
      %p156 = pneg %p155
      // Predicated region
      $region9: #{tpu_custom_call.1} parent=5 // pred_check
        _
      $region10: #{tpu_custom_call.1} parent=5 // pred_check_branch
        %158 = sbr.rel (%p155) target = $region12
      $region11: #{tpu_custom_call.1} parent=5 // pred_region
        %s159 = ssub.s32 %s14, 1
        // Predicated region
        $region13: #{tpu_custom_call.1} parent=11 // pred_check
          %p160 = pneg %p75
        $region14: #{tpu_custom_call.1} parent=11 // pred_check_branch
          %162 = sbr.rel (%p160) target = $region16
        $region15: #{tpu_custom_call.1} parent=11 // pred_region
          %s164 = ssub.s32 4096, 4096
          %165 = vsyncadd [#allocation3], %s164
          %s166 = sshll.u32 [#allocation2], 4
          %s167 = int_to_ptr.vmem [resolvable:$true] %s166
          %172 = dma.hbm_to_vmem [thread:$0]  %s1, 4096, %s167, [#allocation3], 256, 256, 16
        $region16: #{tpu_custom_call.1} parent=11 // pred_fallthru
          _
        // Predicated region
        $region17: #{tpu_custom_call.1} parent=11 // pred_check
          %p173 = pneg %p96
        $region18: #{tpu_custom_call.1} parent=11 // pred_check_branch
          %175 = sbr.rel (%p173) target = $region20
        $region19: #{tpu_custom_call.1} parent=11 // pred_region
          _
        $region20: #{tpu_custom_call.1} parent=11 // pred_fallthru
          _
        // Predicated region
        $region21: #{tpu_custom_call.1} parent=11 // pred_check
          %p176 = pneg %p117
        $region22: #{tpu_custom_call.1} parent=11 // pred_check_branch
          %178 = sbr.rel (%p176) target = $region24
        $region23: #{tpu_custom_call.1} parent=11 // pred_region
          _
        $region24: #{tpu_custom_call.1} parent=11 // pred_fallthru
          _
      $region12: #{tpu_custom_call.1} parent=5 // pred_fallthru
        _
      %p179 = scmp.lt.s32.totalorder %s14, 2
      // Predicated region
      $region25: #{tpu_custom_call.1} parent=5 // pred_check
        %p180 = pneg %p179
      $region26: #{tpu_custom_call.1} parent=5 // pred_check_branch
        %182 = sbr.rel (%p180) target = $region28
      $region27: #{tpu_custom_call.1} parent=5 // pred_region
        // Predicated region
        $region29: #{tpu_custom_call.1} parent=27 // pred_check
          %p183 = pneg %p48
        $region30: #{tpu_custom_call.1} parent=27 // pred_check_branch
          %185 = sbr.rel (%p183) target = $region32
        $region31: #{tpu_custom_call.1} parent=27 // pred_region
          %s186 = smul.u32 2, %s22
          %p187 = scmp.lt.s32.totalorder %s21, 1
          %s188 = scalar_select %p187, %s21, 1
          %p189 = scmp.lt.s32.totalorder %s186, 1
          %s190 = scalar_select %p189, %s186, 1
          %s191 = smul.addr %s188, 2
          %s192 = sadd.s32 %s190, %s191
          %s193 = smul.addr %s192, 2
          %s194 = scalar_lea.vmem %s0, %s193
          %s195 = smul.u32 2, %s22
        $region32: #{tpu_custom_call.1} parent=27 // pred_fallthru
          _
      $region28: #{tpu_custom_call.1} parent=5 // pred_fallthru
        _
      %p196 = scmp.le.s32.totalorder 1, %s14
      %p197 = scmp.lt.s32.totalorder %s14, 3
      %p198 = pnand %p196, %p197
      %p199 = pneg %p198
      // Predicated region
      $region33: #{tpu_custom_call.1} parent=5 // pred_check
        _
      $region34: #{tpu_custom_call.1} parent=5 // pred_check_branch
        %201 = sbr.rel (%p198) target = $region36
      $region35: #{tpu_custom_call.1} parent=5 // pred_region
        %s202 = ssub.s32 %s14, 1
        // Predicated region
        $region37: #{tpu_custom_call.1} parent=35 // pred_check
          %p203 = pneg %p75
        $region38: #{tpu_custom_call.1} parent=35 // pred_check_branch
          %205 = sbr.rel (%p203) target = $region40
        $region39: #{tpu_custom_call.1} parent=35 // pred_region
          %206 = dma.done [#allocation3], 4096
        $region40: #{tpu_custom_call.1} parent=35 // pred_fallthru
          _
        %s207 = smul.u32 2, %s24
        %p208 = scmp.lt.s32.totalorder %s23, 1
        %s209 = scalar_select %p208, %s23, 1
        %p210 = scmp.lt.s32.totalorder %s207, 1
        %s211 = scalar_select %p210, %s207, 1
        %s212 = smul.addr %s209, 2
        %s213 = sadd.s32 %s211, %s212
        %s214 = smul.addr %s213, 2
        %s215 = scalar_lea.vmem %s0, %s214
        %p216 = pneg %p54
        %p217 = pneg %p51
        %p218 = pneg %p75
        %p219 = pneg %p72
        %p220 = pneg %p96
        %p221 = pneg %p93
        %p222 = pneg %p117
        %p223 = pneg %p114
        %p224 = pneg %p145
        %p225 = pneg %p142
        %s226 = sand.u32 %s132, 1
        %s227 = scalar_lea.sflag [#allocation4], %s226
        %s228 = sand.u32 %s132, 1
        %s229 = smul.addr %s228, 16
        %s230 = scalar_lea.vmem [#allocation5], %s229
        %s231 = smul.u32 2, %s24
        %p232 = scmp.lt.s32.totalorder %s23, 1
        %s233 = scalar_select %p232, %s23, 1
        %p234 = scmp.lt.s32.totalorder %s231, 1
        %s235 = scalar_select %p234, %s231, 1
        %s236 = smul.addr %s233, 2
        %s237 = sadd.s32 %s235, %s236
        %s238 = smul.addr %s237, 2
        %s239 = scalar_lea.vmem %s0, %s238
        %s240 = smul.u32 2, %s24
        %s241 = smul.u32 2, %s24
        %v243 = vld [vmem:[%s3] sm:$0xff]
        %245 = vset.pattern.permute.xlu0 0
        %246 = vperm.xlu0 %245, %v243
        %v247 = vpop.permute.xlu0 %246
        %v249 = vld [vmem:[%s239] sm:$0x3]
        %v250 = vld [vmem:[#allocation2] sm:$0xff]
        %v251 = vld [vmem:[#allocation2 + $0x8] sm:$0xff]
        %v252 = vld [vmem:[#allocation2 + $0x10] sm:$0xff]
        %v253 = vld [vmem:[#allocation2 + $0x18] sm:$0xff]
        %v254 = vld [vmem:[#allocation2 + $0x20] sm:$0xff]
        %v255 = vld [vmem:[#allocation2 + $0x28] sm:$0xff]
        %v256 = vld [vmem:[#allocation2 + $0x30] sm:$0xff]
        %v257 = vld [vmem:[#allocation2 + $0x38] sm:$0xff]
        %v258 = vld [vmem:[#allocation2 + $0x40] sm:$0xff]
        %v259 = vld [vmem:[#allocation2 + $0x48] sm:$0xff]
        %v260 = vld [vmem:[#allocation2 + $0x50] sm:$0xff]
        %v261 = vld [vmem:[#allocation2 + $0x58] sm:$0xff]
        %v262 = vld [vmem:[#allocation2 + $0x60] sm:$0xff]
        %v263 = vld [vmem:[#allocation2 + $0x68] sm:$0xff]
        %v264 = vld [vmem:[#allocation2 + $0x70] sm:$0xff]
        %v265 = vld [vmem:[#allocation2 + $0x78] sm:$0xff]
        %v266 = vld [vmem:[#allocation2 + $0x80] sm:$0xff]
        %v267 = vld [vmem:[#allocation2 + $0x88] sm:$0xff]
        %v268 = vld [vmem:[#allocation2 + $0x90] sm:$0xff]
        %v269 = vld [vmem:[#allocation2 + $0x98] sm:$0xff]
        %v270 = vld [vmem:[#allocation2 + $0xa0] sm:$0xff]
        %v271 = vld [vmem:[#allocation2 + $0xa8] sm:$0xff]
        %v272 = vld [vmem:[#allocation2 + $0xb0] sm:$0xff]
        %v273 = vld [vmem:[#allocation2 + $0xb8] sm:$0xff]
        %v274 = vld [vmem:[#allocation2 + $0xc0] sm:$0xff]
        %v275 = vld [vmem:[#allocation2 + $0xc8] sm:$0xff]
        %v276 = vld [vmem:[#allocation2 + $0xd0] sm:$0xff]
        %v277 = vld [vmem:[#allocation2 + $0xd8] sm:$0xff]
        %v278 = vld [vmem:[#allocation2 + $0xe0] sm:$0xff]
        %v279 = vld [vmem:[#allocation2 + $0xe8] sm:$0xff]
        %v280 = vld [vmem:[#allocation2 + $0xf0] sm:$0xff]
        %v281 = vld [vmem:[#allocation2 + $0xf8] sm:$0xff]
        %v314 = vunpack.c.l.b16 %v250
        %v315 = vunpack.c.h.b16 %v250
        %v316 = vunpack.c.l.b16 %v251
        %v317 = vunpack.c.h.b16 %v251
        %v318 = vunpack.c.l.b16 %v252
        %v319 = vunpack.c.h.b16 %v252
        %v320 = vunpack.c.l.b16 %v253
        %v321 = vunpack.c.h.b16 %v253
        %v322 = vunpack.c.l.b16 %v254
        %v323 = vunpack.c.h.b16 %v254
        %v324 = vunpack.c.l.b16 %v255
        %v325 = vunpack.c.h.b16 %v255
        %v326 = vunpack.c.l.b16 %v256
        %v327 = vunpack.c.h.b16 %v256
        %v328 = vunpack.c.l.b16 %v257
        %v329 = vunpack.c.h.b16 %v257
        %v330 = vunpack.c.l.b16 %v258
        %v331 = vunpack.c.h.b16 %v258
        %v332 = vunpack.c.l.b16 %v259
        %v333 = vunpack.c.h.b16 %v259
        %v334 = vunpack.c.l.b16 %v260
        %v335 = vunpack.c.h.b16 %v260
        %v336 = vunpack.c.l.b16 %v261
        %v337 = vunpack.c.h.b16 %v261
        %v338 = vunpack.c.l.b16 %v262
        %v339 = vunpack.c.h.b16 %v262
        %v340 = vunpack.c.l.b16 %v263
        %v341 = vunpack.c.h.b16 %v263
        %v342 = vunpack.c.l.b16 %v264
        %v343 = vunpack.c.h.b16 %v264
        %v344 = vunpack.c.l.b16 %v265
        %v345 = vunpack.c.h.b16 %v265
        %v346 = vunpack.c.l.b16 %v266
        %v347 = vunpack.c.h.b16 %v266
        %v348 = vunpack.c.l.b16 %v267
        %v349 = vunpack.c.h.b16 %v267
        %v350 = vunpack.c.l.b16 %v268
        %v351 = vunpack.c.h.b16 %v268
        %v352 = vunpack.c.l.b16 %v269
        %v353 = vunpack.c.h.b16 %v269
        %v354 = vunpack.c.l.b16 %v270
        %v355 = vunpack.c.h.b16 %v270
        %v356 = vunpack.c.l.b16 %v271
        %v357 = vunpack.c.h.b16 %v271
        %v358 = vunpack.c.l.b16 %v272
        %v359 = vunpack.c.h.b16 %v272
        %v360 = vunpack.c.l.b16 %v273
        %v361 = vunpack.c.h.b16 %v273
        %v362 = vunpack.c.l.b16 %v274
        %v363 = vunpack.c.h.b16 %v274
        %v364 = vunpack.c.l.b16 %v275
        %v365 = vunpack.c.h.b16 %v275
        %v366 = vunpack.c.l.b16 %v276
        %v367 = vunpack.c.h.b16 %v276
        %v368 = vunpack.c.l.b16 %v277
        %v369 = vunpack.c.h.b16 %v277
        %v370 = vunpack.c.l.b16 %v278
        %v371 = vunpack.c.h.b16 %v278
        %v372 = vunpack.c.l.b16 %v279
        %v373 = vunpack.c.h.b16 %v279
        %v374 = vunpack.c.l.b16 %v280
        %v375 = vunpack.c.h.b16 %v280
        %v376 = vunpack.c.l.b16 %v281
        %v377 = vunpack.c.h.b16 %v281
        %v378 = vpack.c.b16 %v318, %v314
        %v379 = vpack.c.b16 %v319, %v315
        %v380 = vpack.c.b16 %v320, %v316
        %v381 = vpack.c.b16 %v321, %v317
        %v382 = vpack.c.b16 %v326, %v322
        %v383 = vpack.c.b16 %v327, %v323
        %v384 = vpack.c.b16 %v328, %v324
        %v385 = vpack.c.b16 %v329, %v325
        %v386 = vpack.c.b16 %v334, %v330
        %v387 = vpack.c.b16 %v335, %v331
        %v388 = vpack.c.b16 %v336, %v332
        %v389 = vpack.c.b16 %v337, %v333
        %v390 = vpack.c.b16 %v342, %v338
        %v391 = vpack.c.b16 %v343, %v339
        %v392 = vpack.c.b16 %v344, %v340
        %v393 = vpack.c.b16 %v345, %v341
        %v394 = vpack.c.b16 %v350, %v346
        %v395 = vpack.c.b16 %v351, %v347
        %v396 = vpack.c.b16 %v352, %v348
        %v397 = vpack.c.b16 %v353, %v349
        %v398 = vpack.c.b16 %v358, %v354
        %v399 = vpack.c.b16 %v359, %v355
        %v400 = vpack.c.b16 %v360, %v356
        %v401 = vpack.c.b16 %v361, %v357
        %v402 = vpack.c.b16 %v366, %v362
        %v403 = vpack.c.b16 %v367, %v363
        %v404 = vpack.c.b16 %v368, %v364
        %v405 = vpack.c.b16 %v369, %v365
        %v406 = vpack.c.b16 %v374, %v370
        %v407 = vpack.c.b16 %v375, %v371
        %v408 = vpack.c.b16 %v376, %v372
        %v409 = vpack.c.b16 %v377, %v373
        %442 = vmatprep.subr.bf16.mxu0 %v407
        %443 = vmatpush1.bf16.msra.mxu0 %v406
        %444 = vmatprep.subr.bf16.mxu0 %v403
        %445 = vmatpush1.bf16.msra.mxu0 %v402
        %446 = vmatprep.subr.bf16.mxu0 %v399
        %447 = vmatpush1.bf16.msra.mxu0 %v398
        %448 = vmatprep.subr.bf16.mxu0 %v395
        %449 = vmatpush1.bf16.msra.mxu0 %v394
        %450 = vmatprep.subr.bf16.mxu0 %v391
        %451 = vmatpush1.bf16.msra.mxu0 %v390
        %452 = vmatprep.subr.bf16.mxu0 %v387
        %453 = vmatpush1.bf16.msra.mxu0 %v386
        %454 = vmatprep.subr.bf16.mxu0 %v383
        %455 = vmatpush1.bf16.msra.mxu0 %v382
        %456 = vmatprep.subr.bf16.mxu0 %v379
        %457 = vmatpush1.bf16.msra.mxu0 %v378
        %458 = vmatprep.subr.bf16.mxu0 0
        %459 = vmatpush2.bf16.msra.mxu0 0
        %460 = vmatprep.subr.bf16.mxu0 0
        %461 = vmatpush2.bf16.msra.mxu0 0
        %462 = vmatprep.subr.bf16.mxu0 0
        %463 = vmatpush2.bf16.msra.mxu0 0
        %464 = vmatprep.subr.bf16.mxu0 0
        %465 = vmatpush2.bf16.msra.mxu0 0
        %466 = vmatprep.subr.bf16.mxu0 0
        %467 = vmatpush2.bf16.msra.mxu0 0
        %468 = vmatprep.subr.bf16.mxu0 0
        %469 = vmatpush2.bf16.msra.mxu0 0
        %470 = vmatprep.subr.bf16.mxu0 0
        %471 = vmatpush2.bf16.msra.mxu0 0
        %472 = vmatprep.subr.bf16.mxu0 0
        %473 = vmatpush2.bf16.msra.mxu0 0
        %474 = vmatprep.mubr.bf16.mxu0 0
        %475 = vmatmul.mubr.bf16.gmra.mxu0 %v249
        %v476 = vpop.f32.mrf.mxu0
        %v477 = vadd.f32 0.0, %v476
        %v478 = vpop.f32.mrf.mxu0
        %v479 = vadd.f32 0.0, %v478
        %v480 = vpop.f32.mrf.mxu0
        %v481 = vpop.f32.mrf.mxu0
        %482 = vdwg.mxu0
        %483 = vmatprep.subr.bf16.mxu0 %v409
        %484 = vmatpush1.bf16.msra.mxu0 %v408
        %485 = vmatprep.subr.bf16.mxu0 %v405
        %486 = vmatpush1.bf16.msra.mxu0 %v404
        %487 = vmatprep.subr.bf16.mxu0 %v401
        %488 = vmatpush1.bf16.msra.mxu0 %v400
        %489 = vmatprep.subr.bf16.mxu0 %v397
        %490 = vmatpush1.bf16.msra.mxu0 %v396
        %491 = vmatprep.subr.bf16.mxu0 %v393
        %492 = vmatpush1.bf16.msra.mxu0 %v392
        %493 = vmatprep.subr.bf16.mxu0 %v389
        %494 = vmatpush1.bf16.msra.mxu0 %v388
        %495 = vmatprep.subr.bf16.mxu0 %v385
        %496 = vmatpush1.bf16.msra.mxu0 %v384
        %497 = vmatprep.subr.bf16.mxu0 %v381
        %498 = vmatpush1.bf16.msra.mxu0 %v380
        %499 = vmatprep.subr.bf16.mxu0 0
        %500 = vmatpush2.bf16.msra.mxu0 0
        %501 = vmatprep.subr.bf16.mxu0 0
        %502 = vmatpush2.bf16.msra.mxu0 0
        %503 = vmatprep.subr.bf16.mxu0 0
        %504 = vmatpush2.bf16.msra.mxu0 0
        %505 = vmatprep.subr.bf16.mxu0 0
        %506 = vmatpush2.bf16.msra.mxu0 0
        %507 = vmatprep.subr.bf16.mxu0 0
        %508 = vmatpush2.bf16.msra.mxu0 0
        %509 = vmatprep.subr.bf16.mxu0 0
        %510 = vmatpush2.bf16.msra.mxu0 0
        %511 = vmatprep.subr.bf16.mxu0 0
        %512 = vmatpush2.bf16.msra.mxu0 0
        %513 = vmatprep.subr.bf16.mxu0 0
        %514 = vmatpush2.bf16.msra.mxu0 0
        %515 = vmatprep.mubr.bf16.mxu0 0
        %516 = vmatmul.mubr.bf16.gmra.mxu0 %v249
        %v517 = vpop.f32.mrf.mxu0
        %v518 = vadd.f32 0.0, %v517
        %v519 = vpop.f32.mrf.mxu0
        %v520 = vadd.f32 0.0, %v519
        %v521 = vpop.f32.mrf.mxu0
        %v522 = vpop.f32.mrf.mxu0
        %523 = vdwg.mxu0
        %v524 = vpack.c.bf16 %v477, %v477
        %v525 = vpack.c.bf16 %v479, %v479
        %v526 = vpack.c.bf16 %v518, %v518
        %v527 = vpack.c.bf16 %v520, %v520
        %v528 = vld [vmem:[%s2] sm:$0xf]
        %vm529 = vcmask 31744
        %v531 = vsel %vm529, %v528, 0
        %vm533 = vcmask 1041408
        %v535 = vsel %vm533, %v524, 0
        %537 = vmatprep.subr.bf16.mxu0 0
        %538 = vmatpush1.bf16.msra.mxu0 0
        %539 = vmatprep.subr.bf16.mxu0 0
        %540 = vmatpush1.bf16.msra.mxu0 0
        %541 = vmatprep.subr.bf16.mxu0 0
        %542 = vmatpush1.bf16.msra.mxu0 0
        %543 = vmatprep.subr.bf16.mxu0 0
        %544 = vmatpush1.bf16.msra.mxu0 0
        %545 = vmatprep.subr.bf16.mxu0 0
        %546 = vmatpush1.bf16.msra.mxu0 0
        %547 = vmatprep.subr.bf16.mxu0 0
        %548 = vmatpush1.bf16.msra.mxu0 0
        %549 = vmatprep.subr.bf16.mxu0 0
        %550 = vmatpush1.bf16.msra.mxu0 0
        %551 = vmatprep.subr.bf16.mxu0 0
        %552 = vmatpush1.bf16.msra.mxu0 %v535
        %553 = vmatprep.subr.bf16.mxu0 0
        %554 = vmatpush2.bf16.msra.mxu0 0
        %555 = vmatprep.subr.bf16.mxu0 0
        %556 = vmatpush2.bf16.msra.mxu0 0
        %557 = vmatprep.subr.bf16.mxu0 0
        %558 = vmatpush2.bf16.msra.mxu0 0
        %559 = vmatprep.subr.bf16.mxu0 0
        %560 = vmatpush2.bf16.msra.mxu0 0
        %561 = vmatprep.subr.bf16.mxu0 0
        %562 = vmatpush2.bf16.msra.mxu0 0
        %563 = vmatprep.subr.bf16.mxu0 0
        %564 = vmatpush2.bf16.msra.mxu0 0
        %565 = vmatprep.subr.bf16.mxu0 0
        %566 = vmatpush2.bf16.msra.mxu0 0
        %567 = vmatprep.subr.bf16.mxu0 0
        %568 = vmatpush2.bf16.msra.mxu0 0
        %569 = vmatprep.mubr.bf16.mxu0 0
        %570 = vmatmul.mubr.bf16.gmra.mxu0 %v531
        %v571 = vpop.f32.mrf.mxu0
        %v572 = vadd.f32 0.0, %v571
        %v573 = vpop.f32.mrf.mxu0
        %v574 = vpop.f32.mrf.mxu0
        %v575 = vpop.f32.mrf.mxu0
        %576 = vdwg.mxu0
        %v577 = vadd.f32 %v247, %v572
        %s578 = scalar_lea.vmem %s2, 4
        %v579 = vld [vmem:[%s578] sm:$0xf]
        %v581 = vsel %vm529, %v579, 0
        %v584 = vsel %vm533, %v525, 0
        %586 = vmatprep.subr.bf16.mxu0 0
        %587 = vmatpush1.bf16.msra.mxu0 0
        %588 = vmatprep.subr.bf16.mxu0 0
        %589 = vmatpush1.bf16.msra.mxu0 0
        %590 = vmatprep.subr.bf16.mxu0 0
        %591 = vmatpush1.bf16.msra.mxu0 0
        %592 = vmatprep.subr.bf16.mxu0 0
        %593 = vmatpush1.bf16.msra.mxu0 0
        %594 = vmatprep.subr.bf16.mxu0 0
        %595 = vmatpush1.bf16.msra.mxu0 0
        %596 = vmatprep.subr.bf16.mxu0 0
        %597 = vmatpush1.bf16.msra.mxu0 0
        %598 = vmatprep.subr.bf16.mxu0 0
        %599 = vmatpush1.bf16.msra.mxu0 0
        %600 = vmatprep.subr.bf16.mxu0 0
        %601 = vmatpush1.bf16.msra.mxu0 %v584
        %602 = vmatprep.subr.bf16.mxu0 0
        %603 = vmatpush2.bf16.msra.mxu0 0
        %604 = vmatprep.subr.bf16.mxu0 0
        %605 = vmatpush2.bf16.msra.mxu0 0
        %606 = vmatprep.subr.bf16.mxu0 0
        %607 = vmatpush2.bf16.msra.mxu0 0
        %608 = vmatprep.subr.bf16.mxu0 0
        %609 = vmatpush2.bf16.msra.mxu0 0
        %610 = vmatprep.subr.bf16.mxu0 0
        %611 = vmatpush2.bf16.msra.mxu0 0
        %612 = vmatprep.subr.bf16.mxu0 0
        %613 = vmatpush2.bf16.msra.mxu0 0
        %614 = vmatprep.subr.bf16.mxu0 0
        %615 = vmatpush2.bf16.msra.mxu0 0
        %616 = vmatprep.subr.bf16.mxu0 0
        %617 = vmatpush2.bf16.msra.mxu0 0
        %618 = vmatprep.mubr.bf16.mxu0 0
        %619 = vmatmul.mubr.bf16.gmra.mxu0 %v581
        %v620 = vpop.f32.mrf.mxu0
        %v621 = vadd.f32 0.0, %v620
        %v622 = vpop.f32.mrf.mxu0
        %v623 = vpop.f32.mrf.mxu0
        %v624 = vpop.f32.mrf.mxu0
        %625 = vdwg.mxu0
        %v626 = vadd.f32 %v577, %v621
        %s627 = scalar_lea.vmem %s2, 8
        %v628 = vld [vmem:[%s627] sm:$0xf]
        %v630 = vsel %vm529, %v628, 0
        %v633 = vsel %vm533, %v526, 0
        %635 = vmatprep.subr.bf16.mxu0 0
        %636 = vmatpush1.bf16.msra.mxu0 0
        %637 = vmatprep.subr.bf16.mxu0 0
        %638 = vmatpush1.bf16.msra.mxu0 0
        %639 = vmatprep.subr.bf16.mxu0 0
        %640 = vmatpush1.bf16.msra.mxu0 0
        %641 = vmatprep.subr.bf16.mxu0 0
        %642 = vmatpush1.bf16.msra.mxu0 0
        %643 = vmatprep.subr.bf16.mxu0 0
        %644 = vmatpush1.bf16.msra.mxu0 0
        %645 = vmatprep.subr.bf16.mxu0 0
        %646 = vmatpush1.bf16.msra.mxu0 0
        %647 = vmatprep.subr.bf16.mxu0 0
        %648 = vmatpush1.bf16.msra.mxu0 0
        %649 = vmatprep.subr.bf16.mxu0 0
        %650 = vmatpush1.bf16.msra.mxu0 %v633
        %651 = vmatprep.subr.bf16.mxu0 0
        %652 = vmatpush2.bf16.msra.mxu0 0
        %653 = vmatprep.subr.bf16.mxu0 0
        %654 = vmatpush2.bf16.msra.mxu0 0
        %655 = vmatprep.subr.bf16.mxu0 0
        %656 = vmatpush2.bf16.msra.mxu0 0
        %657 = vmatprep.subr.bf16.mxu0 0
        %658 = vmatpush2.bf16.msra.mxu0 0
        %659 = vmatprep.subr.bf16.mxu0 0
        %660 = vmatpush2.bf16.msra.mxu0 0
        %661 = vmatprep.subr.bf16.mxu0 0
        %662 = vmatpush2.bf16.msra.mxu0 0
        %663 = vmatprep.subr.bf16.mxu0 0
        %664 = vmatpush2.bf16.msra.mxu0 0
        %665 = vmatprep.subr.bf16.mxu0 0
        %666 = vmatpush2.bf16.msra.mxu0 0
        %667 = vmatprep.mubr.bf16.mxu0 0
        %668 = vmatmul.mubr.bf16.gmra.mxu0 %v630
        %v669 = vpop.f32.mrf.mxu0
        %v670 = vadd.f32 0.0, %v669
        %v671 = vpop.f32.mrf.mxu0
        %v672 = vpop.f32.mrf.mxu0
        %v673 = vpop.f32.mrf.mxu0
        %674 = vdwg.mxu0
        %v675 = vadd.f32 %v626, %v670
        %s676 = scalar_lea.vmem %s2, 12
        %v677 = vld [vmem:[%s676] sm:$0xf]
        %v679 = vsel %vm529, %v677, 0
        %v682 = vsel %vm533, %v527, 0
        %684 = vmatprep.subr.bf16.mxu0 0
        %685 = vmatpush1.bf16.msra.mxu0 0
        %686 = vmatprep.subr.bf16.mxu0 0
        %687 = vmatpush1.bf16.msra.mxu0 0
        %688 = vmatprep.subr.bf16.mxu0 0
        %689 = vmatpush1.bf16.msra.mxu0 0
        %690 = vmatprep.subr.bf16.mxu0 0
        %691 = vmatpush1.bf16.msra.mxu0 0
        %692 = vmatprep.subr.bf16.mxu0 0
        %693 = vmatpush1.bf16.msra.mxu0 0
        %694 = vmatprep.subr.bf16.mxu0 0
        %695 = vmatpush1.bf16.msra.mxu0 0
        %696 = vmatprep.subr.bf16.mxu0 0
        %697 = vmatpush1.bf16.msra.mxu0 0
        %698 = vmatprep.subr.bf16.mxu0 0
        %699 = vmatpush1.bf16.msra.mxu0 %v682
        %700 = vmatprep.subr.bf16.mxu0 0
        %701 = vmatpush2.bf16.msra.mxu0 0
        %702 = vmatprep.subr.bf16.mxu0 0
        %703 = vmatpush2.bf16.msra.mxu0 0
        %704 = vmatprep.subr.bf16.mxu0 0
        %705 = vmatpush2.bf16.msra.mxu0 0
        %706 = vmatprep.subr.bf16.mxu0 0
        %707 = vmatpush2.bf16.msra.mxu0 0
        %708 = vmatprep.subr.bf16.mxu0 0
        %709 = vmatpush2.bf16.msra.mxu0 0
        %710 = vmatprep.subr.bf16.mxu0 0
        %711 = vmatpush2.bf16.msra.mxu0 0
        %712 = vmatprep.subr.bf16.mxu0 0
        %713 = vmatpush2.bf16.msra.mxu0 0
        %714 = vmatprep.subr.bf16.mxu0 0
        %715 = vmatpush2.bf16.msra.mxu0 0
        %716 = vmatprep.mubr.bf16.mxu0 0
        %717 = vmatmul.mubr.bf16.gmra.mxu0 %v679
        %v718 = vpop.f32.mrf.mxu0
        %v719 = vadd.f32 0.0, %v718
        %v720 = vpop.f32.mrf.mxu0
        %v721 = vpop.f32.mrf.mxu0
        %v722 = vpop.f32.mrf.mxu0
        %723 = vdwg.mxu0
        %v724 = vadd.f32 %v675, %v719
        %v725 = vmax.f32 %v724, 0.0
        %726 = vst [vmem:[%s230] sm:$0xff] %v725
        %v727 = vld [vmem:[%s239 + $0x2] sm:$0x3]
        %v728 = vld [vmem:[#allocation2] sm:$0xff]
        %v729 = vld [vmem:[#allocation2 + $0x8] sm:$0xff]
        %v730 = vld [vmem:[#allocation2 + $0x10] sm:$0xff]
        %v731 = vld [vmem:[#allocation2 + $0x18] sm:$0xff]
        %v732 = vld [vmem:[#allocation2 + $0x20] sm:$0xff]
        %v733 = vld [vmem:[#allocation2 + $0x28] sm:$0xff]
        %v734 = vld [vmem:[#allocation2 + $0x30] sm:$0xff]
        %v735 = vld [vmem:[#allocation2 + $0x38] sm:$0xff]
        %v736 = vld [vmem:[#allocation2 + $0x40] sm:$0xff]
        %v737 = vld [vmem:[#allocation2 + $0x48] sm:$0xff]
        %v738 = vld [vmem:[#allocation2 + $0x50] sm:$0xff]
        %v739 = vld [vmem:[#allocation2 + $0x58] sm:$0xff]
        %v740 = vld [vmem:[#allocation2 + $0x60] sm:$0xff]
        %v741 = vld [vmem:[#allocation2 + $0x68] sm:$0xff]
        %v742 = vld [vmem:[#allocation2 + $0x70] sm:$0xff]
        %v743 = vld [vmem:[#allocation2 + $0x78] sm:$0xff]
        %v744 = vld [vmem:[#allocation2 + $0x80] sm:$0xff]
        %v745 = vld [vmem:[#allocation2 + $0x88] sm:$0xff]
        %v746 = vld [vmem:[#allocation2 + $0x90] sm:$0xff]
        %v747 = vld [vmem:[#allocation2 + $0x98] sm:$0xff]
        %v748 = vld [vmem:[#allocation2 + $0xa0] sm:$0xff]
        %v749 = vld [vmem:[#allocation2 + $0xa8] sm:$0xff]
        %v750 = vld [vmem:[#allocation2 + $0xb0] sm:$0xff]
        %v751 = vld [vmem:[#allocation2 + $0xb8] sm:$0xff]
        %v752 = vld [vmem:[#allocation2 + $0xc0] sm:$0xff]
        %v753 = vld [vmem:[#allocation2 + $0xc8] sm:$0xff]
        %v754 = vld [vmem:[#allocation2 + $0xd0] sm:$0xff]
        %v755 = vld [vmem:[#allocation2 + $0xd8] sm:$0xff]
        %v756 = vld [vmem:[#allocation2 + $0xe0] sm:$0xff]
        %v757 = vld [vmem:[#allocation2 + $0xe8] sm:$0xff]
        %v758 = vld [vmem:[#allocation2 + $0xf0] sm:$0xff]
        %v759 = vld [vmem:[#allocation2 + $0xf8] sm:$0xff]
        %v792 = vunpack.c.l.b16 %v728
        %v793 = vunpack.c.h.b16 %v728
        %v794 = vunpack.c.l.b16 %v729
        %v795 = vunpack.c.h.b16 %v729
        %v796 = vunpack.c.l.b16 %v730
        %v797 = vunpack.c.h.b16 %v730
        %v798 = vunpack.c.l.b16 %v731
        %v799 = vunpack.c.h.b16 %v731
        %v800 = vunpack.c.l.b16 %v732
        %v801 = vunpack.c.h.b16 %v732
        %v802 = vunpack.c.l.b16 %v733
        %v803 = vunpack.c.h.b16 %v733
        %v804 = vunpack.c.l.b16 %v734
        %v805 = vunpack.c.h.b16 %v734
        %v806 = vunpack.c.l.b16 %v735
        %v807 = vunpack.c.h.b16 %v735
        %v808 = vunpack.c.l.b16 %v736
        %v809 = vunpack.c.h.b16 %v736
        %v810 = vunpack.c.l.b16 %v737
        %v811 = vunpack.c.h.b16 %v737
        %v812 = vunpack.c.l.b16 %v738
        %v813 = vunpack.c.h.b16 %v738
        %v814 = vunpack.c.l.b16 %v739
        %v815 = vunpack.c.h.b16 %v739
        %v816 = vunpack.c.l.b16 %v740
        %v817 = vunpack.c.h.b16 %v740
        %v818 = vunpack.c.l.b16 %v741
        %v819 = vunpack.c.h.b16 %v741
        %v820 = vunpack.c.l.b16 %v742
        %v821 = vunpack.c.h.b16 %v742
        %v822 = vunpack.c.l.b16 %v743
        %v823 = vunpack.c.h.b16 %v743
        %v824 = vunpack.c.l.b16 %v744
        %v825 = vunpack.c.h.b16 %v744
        %v826 = vunpack.c.l.b16 %v745
        %v827 = vunpack.c.h.b16 %v745
        %v828 = vunpack.c.l.b16 %v746
        %v829 = vunpack.c.h.b16 %v746
        %v830 = vunpack.c.l.b16 %v747
        %v831 = vunpack.c.h.b16 %v747
        %v832 = vunpack.c.l.b16 %v748
        %v833 = vunpack.c.h.b16 %v748
        %v834 = vunpack.c.l.b16 %v749
        %v835 = vunpack.c.h.b16 %v749
        %v836 = vunpack.c.l.b16 %v750
        %v837 = vunpack.c.h.b16 %v750
        %v838 = vunpack.c.l.b16 %v751
        %v839 = vunpack.c.h.b16 %v751
        %v840 = vunpack.c.l.b16 %v752
        %v841 = vunpack.c.h.b16 %v752
        %v842 = vunpack.c.l.b16 %v753
        %v843 = vunpack.c.h.b16 %v753
        %v844 = vunpack.c.l.b16 %v754
        %v845 = vunpack.c.h.b16 %v754
        %v846 = vunpack.c.l.b16 %v755
        %v847 = vunpack.c.h.b16 %v755
        %v848 = vunpack.c.l.b16 %v756
        %v849 = vunpack.c.h.b16 %v756
        %v850 = vunpack.c.l.b16 %v757
        %v851 = vunpack.c.h.b16 %v757
        %v852 = vunpack.c.l.b16 %v758
        %v853 = vunpack.c.h.b16 %v758
        %v854 = vunpack.c.l.b16 %v759
        %v855 = vunpack.c.h.b16 %v759
        %v856 = vpack.c.b16 %v796, %v792
        %v857 = vpack.c.b16 %v797, %v793
        %v858 = vpack.c.b16 %v798, %v794
        %v859 = vpack.c.b16 %v799, %v795
        %v860 = vpack.c.b16 %v804, %v800
        %v861 = vpack.c.b16 %v805, %v801
        %v862 = vpack.c.b16 %v806, %v802
        %v863 = vpack.c.b16 %v807, %v803
        %v864 = vpack.c.b16 %v812, %v808
        %v865 = vpack.c.b16 %v813, %v809
        %v866 = vpack.c.b16 %v814, %v810
        %v867 = vpack.c.b16 %v815, %v811
        %v868 = vpack.c.b16 %v820, %v816
        %v869 = vpack.c.b16 %v821, %v817
        %v870 = vpack.c.b16 %v822, %v818
        %v871 = vpack.c.b16 %v823, %v819
        %v872 = vpack.c.b16 %v828, %v824
        %v873 = vpack.c.b16 %v829, %v825
        %v874 = vpack.c.b16 %v830, %v826
        %v875 = vpack.c.b16 %v831, %v827
        %v876 = vpack.c.b16 %v836, %v832
        %v877 = vpack.c.b16 %v837, %v833
        %v878 = vpack.c.b16 %v838, %v834
        %v879 = vpack.c.b16 %v839, %v835
        %v880 = vpack.c.b16 %v844, %v840
        %v881 = vpack.c.b16 %v845, %v841
        %v882 = vpack.c.b16 %v846, %v842
        %v883 = vpack.c.b16 %v847, %v843
        %v884 = vpack.c.b16 %v852, %v848
        %v885 = vpack.c.b16 %v853, %v849
        %v886 = vpack.c.b16 %v854, %v850
        %v887 = vpack.c.b16 %v855, %v851
        %920 = vmatprep.subr.bf16.mxu0 %v885
        %921 = vmatpush1.bf16.msra.mxu0 %v884
        %922 = vmatprep.subr.bf16.mxu0 %v881
        %923 = vmatpush1.bf16.msra.mxu0 %v880
        %924 = vmatprep.subr.bf16.mxu0 %v877
        %925 = vmatpush1.bf16.msra.mxu0 %v876
        %926 = vmatprep.subr.bf16.mxu0 %v873
        %927 = vmatpush1.bf16.msra.mxu0 %v872
        %928 = vmatprep.subr.bf16.mxu0 %v869
        %929 = vmatpush1.bf16.msra.mxu0 %v868
        %930 = vmatprep.subr.bf16.mxu0 %v865
        %931 = vmatpush1.bf16.msra.mxu0 %v864
        %932 = vmatprep.subr.bf16.mxu0 %v861
        %933 = vmatpush1.bf16.msra.mxu0 %v860
        %934 = vmatprep.subr.bf16.mxu0 %v857
        %935 = vmatpush1.bf16.msra.mxu0 %v856
        %936 = vmatprep.subr.bf16.mxu0 0
        %937 = vmatpush2.bf16.msra.mxu0 0
        %938 = vmatprep.subr.bf16.mxu0 0
        %939 = vmatpush2.bf16.msra.mxu0 0
        %940 = vmatprep.subr.bf16.mxu0 0
        %941 = vmatpush2.bf16.msra.mxu0 0
        %942 = vmatprep.subr.bf16.mxu0 0
        %943 = vmatpush2.bf16.msra.mxu0 0
        %944 = vmatprep.subr.bf16.mxu0 0
        %945 = vmatpush2.bf16.msra.mxu0 0
        %946 = vmatprep.subr.bf16.mxu0 0
        %947 = vmatpush2.bf16.msra.mxu0 0
        %948 = vmatprep.subr.bf16.mxu0 0
        %949 = vmatpush2.bf16.msra.mxu0 0
        %950 = vmatprep.subr.bf16.mxu0 0
        %951 = vmatpush2.bf16.msra.mxu0 0
        %952 = vmatprep.mubr.bf16.mxu0 0
        %953 = vmatmul.mubr.bf16.gmra.mxu0 %v727
        %v954 = vpop.f32.mrf.mxu0
        %v955 = vadd.f32 0.0, %v954
        %v956 = vpop.f32.mrf.mxu0
        %v957 = vadd.f32 0.0, %v956
        %v958 = vpop.f32.mrf.mxu0
        %v959 = vpop.f32.mrf.mxu0
        %960 = vdwg.mxu0
        %961 = vmatprep.subr.bf16.mxu0 %v887
        %962 = vmatpush1.bf16.msra.mxu0 %v886
        %963 = vmatprep.subr.bf16.mxu0 %v883
        %964 = vmatpush1.bf16.msra.mxu0 %v882
        %965 = vmatprep.subr.bf16.mxu0 %v879
        %966 = vmatpush1.bf16.msra.mxu0 %v878
        %967 = vmatprep.subr.bf16.mxu0 %v875
        %968 = vmatpush1.bf16.msra.mxu0 %v874
        %969 = vmatprep.subr.bf16.mxu0 %v871
        %970 = vmatpush1.bf16.msra.mxu0 %v870
        %971 = vmatprep.subr.bf16.mxu0 %v867
        %972 = vmatpush1.bf16.msra.mxu0 %v866
        %973 = vmatprep.subr.bf16.mxu0 %v863
        %974 = vmatpush1.bf16.msra.mxu0 %v862
        %975 = vmatprep.subr.bf16.mxu0 %v859
        %976 = vmatpush1.bf16.msra.mxu0 %v858
        %977 = vmatprep.subr.bf16.mxu0 0
        %978 = vmatpush2.bf16.msra.mxu0 0
        %979 = vmatprep.subr.bf16.mxu0 0
        %980 = vmatpush2.bf16.msra.mxu0 0
        %981 = vmatprep.subr.bf16.mxu0 0
        %982 = vmatpush2.bf16.msra.mxu0 0
        %983 = vmatprep.subr.bf16.mxu0 0
        %984 = vmatpush2.bf16.msra.mxu0 0
        %985 = vmatprep.subr.bf16.mxu0 0
        %986 = vmatpush2.bf16.msra.mxu0 0
        %987 = vmatprep.subr.bf16.mxu0 0
        %988 = vmatpush2.bf16.msra.mxu0 0
        %989 = vmatprep.subr.bf16.mxu0 0
        %990 = vmatpush2.bf16.msra.mxu0 0
        %991 = vmatprep.subr.bf16.mxu0 0
        %992 = vmatpush2.bf16.msra.mxu0 0
        %993 = vmatprep.mubr.bf16.mxu0 0
        %994 = vmatmul.mubr.bf16.gmra.mxu0 %v727
        %v995 = vpop.f32.mrf.mxu0
        %v996 = vadd.f32 0.0, %v995
        %v997 = vpop.f32.mrf.mxu0
        %v998 = vadd.f32 0.0, %v997
        %v999 = vpop.f32.mrf.mxu0
        %v1000 = vpop.f32.mrf.mxu0
        %1001 = vdwg.mxu0
        %v1002 = vpack.c.bf16 %v955, %v955
        %v1003 = vpack.c.bf16 %v957, %v957
        %v1004 = vpack.c.bf16 %v996, %v996
        %v1005 = vpack.c.bf16 %v998, %v998
        %v1006 = vld [vmem:[%s2] sm:$0xf]
        %v1008 = vsel %vm529, %v1006, 0
        %v1011 = vsel %vm533, %v1002, 0
        %1013 = vmatprep.subr.bf16.mxu0 0
        %1014 = vmatpush1.bf16.msra.mxu0 0
        %1015 = vmatprep.subr.bf16.mxu0 0
        %1016 = vmatpush1.bf16.msra.mxu0 0
        %1017 = vmatprep.subr.bf16.mxu0 0
        %1018 = vmatpush1.bf16.msra.mxu0 0
        %1019 = vmatprep.subr.bf16.mxu0 0
        %1020 = vmatpush1.bf16.msra.mxu0 0
        %1021 = vmatprep.subr.bf16.mxu0 0
        %1022 = vmatpush1.bf16.msra.mxu0 0
        %1023 = vmatprep.subr.bf16.mxu0 0
        %1024 = vmatpush1.bf16.msra.mxu0 0
        %1025 = vmatprep.subr.bf16.mxu0 0
        %1026 = vmatpush1.bf16.msra.mxu0 0
        %1027 = vmatprep.subr.bf16.mxu0 0
        %1028 = vmatpush1.bf16.msra.mxu0 %v1011
        %1029 = vmatprep.subr.bf16.mxu0 0
        %1030 = vmatpush2.bf16.msra.mxu0 0
        %1031 = vmatprep.subr.bf16.mxu0 0
        %1032 = vmatpush2.bf16.msra.mxu0 0
        %1033 = vmatprep.subr.bf16.mxu0 0
        %1034 = vmatpush2.bf16.msra.mxu0 0
        %1035 = vmatprep.subr.bf16.mxu0 0
        %1036 = vmatpush2.bf16.msra.mxu0 0
        %1037 = vmatprep.subr.bf16.mxu0 0
        %1038 = vmatpush2.bf16.msra.mxu0 0
        %1039 = vmatprep.subr.bf16.mxu0 0
        %1040 = vmatpush2.bf16.msra.mxu0 0
        %1041 = vmatprep.subr.bf16.mxu0 0
        %1042 = vmatpush2.bf16.msra.mxu0 0
        %1043 = vmatprep.subr.bf16.mxu0 0
        %1044 = vmatpush2.bf16.msra.mxu0 0
        %1045 = vmatprep.mubr.bf16.mxu0 0
        %1046 = vmatmul.mubr.bf16.gmra.mxu0 %v1008
        %v1047 = vpop.f32.mrf.mxu0
        %v1048 = vadd.f32 0.0, %v1047
        %v1049 = vpop.f32.mrf.mxu0
        %v1050 = vpop.f32.mrf.mxu0
        %v1051 = vpop.f32.mrf.mxu0
        %1052 = vdwg.mxu0
        %v1053 = vadd.f32 %v247, %v1048
        %v1054 = vld [vmem:[%s578] sm:$0xf]
        %v1056 = vsel %vm529, %v1054, 0
        %v1059 = vsel %vm533, %v1003, 0
        %1061 = vmatprep.subr.bf16.mxu0 0
        %1062 = vmatpush1.bf16.msra.mxu0 0
        %1063 = vmatprep.subr.bf16.mxu0 0
        %1064 = vmatpush1.bf16.msra.mxu0 0
        %1065 = vmatprep.subr.bf16.mxu0 0
        %1066 = vmatpush1.bf16.msra.mxu0 0
        %1067 = vmatprep.subr.bf16.mxu0 0
        %1068 = vmatpush1.bf16.msra.mxu0 0
        %1069 = vmatprep.subr.bf16.mxu0 0
        %1070 = vmatpush1.bf16.msra.mxu0 0
        %1071 = vmatprep.subr.bf16.mxu0 0
        %1072 = vmatpush1.bf16.msra.mxu0 0
        %1073 = vmatprep.subr.bf16.mxu0 0
        %1074 = vmatpush1.bf16.msra.mxu0 0
        %1075 = vmatprep.subr.bf16.mxu0 0
        %1076 = vmatpush1.bf16.msra.mxu0 %v1059
        %1077 = vmatprep.subr.bf16.mxu0 0
        %1078 = vmatpush2.bf16.msra.mxu0 0
        %1079 = vmatprep.subr.bf16.mxu0 0
        %1080 = vmatpush2.bf16.msra.mxu0 0
        %1081 = vmatprep.subr.bf16.mxu0 0
        %1082 = vmatpush2.bf16.msra.mxu0 0
        %1083 = vmatprep.subr.bf16.mxu0 0
        %1084 = vmatpush2.bf16.msra.mxu0 0
        %1085 = vmatprep.subr.bf16.mxu0 0
        %1086 = vmatpush2.bf16.msra.mxu0 0
        %1087 = vmatprep.subr.bf16.mxu0 0
        %1088 = vmatpush2.bf16.msra.mxu0 0
        %1089 = vmatprep.subr.bf16.mxu0 0
        %1090 = vmatpush2.bf16.msra.mxu0 0
        %1091 = vmatprep.subr.bf16.mxu0 0
        %1092 = vmatpush2.bf16.msra.mxu0 0
        %1093 = vmatprep.mubr.bf16.mxu0 0
        %1094 = vmatmul.mubr.bf16.gmra.mxu0 %v1056
        %v1095 = vpop.f32.mrf.mxu0
        %v1096 = vadd.f32 0.0, %v1095
        %v1097 = vpop.f32.mrf.mxu0
        %v1098 = vpop.f32.mrf.mxu0
        %v1099 = vpop.f32.mrf.mxu0
        %1100 = vdwg.mxu0
        %v1101 = vadd.f32 %v1053, %v1096
        %v1102 = vld [vmem:[%s627] sm:$0xf]
        %v1104 = vsel %vm529, %v1102, 0
        %v1107 = vsel %vm533, %v1004, 0
        %1109 = vmatprep.subr.bf16.mxu0 0
        %1110 = vmatpush1.bf16.msra.mxu0 0
        %1111 = vmatprep.subr.bf16.mxu0 0
        %1112 = vmatpush1.bf16.msra.mxu0 0
        %1113 = vmatprep.subr.bf16.mxu0 0
        %1114 = vmatpush1.bf16.msra.mxu0 0
        %1115 = vmatprep.subr.bf16.mxu0 0
        %1116 = vmatpush1.bf16.msra.mxu0 0
        %1117 = vmatprep.subr.bf16.mxu0 0
        %1118 = vmatpush1.bf16.msra.mxu0 0
        %1119 = vmatprep.subr.bf16.mxu0 0
        %1120 = vmatpush1.bf16.msra.mxu0 0
        %1121 = vmatprep.subr.bf16.mxu0 0
        %1122 = vmatpush1.bf16.msra.mxu0 0
        %1123 = vmatprep.subr.bf16.mxu0 0
        %1124 = vmatpush1.bf16.msra.mxu0 %v1107
        %1125 = vmatprep.subr.bf16.mxu0 0
        %1126 = vmatpush2.bf16.msra.mxu0 0
        %1127 = vmatprep.subr.bf16.mxu0 0
        %1128 = vmatpush2.bf16.msra.mxu0 0
        %1129 = vmatprep.subr.bf16.mxu0 0
        %1130 = vmatpush2.bf16.msra.mxu0 0
        %1131 = vmatprep.subr.bf16.mxu0 0
        %1132 = vmatpush2.bf16.msra.mxu0 0
        %1133 = vmatprep.subr.bf16.mxu0 0
        %1134 = vmatpush2.bf16.msra.mxu0 0
        %1135 = vmatprep.subr.bf16.mxu0 0
        %1136 = vmatpush2.bf16.msra.mxu0 0
        %1137 = vmatprep.subr.bf16.mxu0 0
        %1138 = vmatpush2.bf16.msra.mxu0 0
        %1139 = vmatprep.subr.bf16.mxu0 0
        %1140 = vmatpush2.bf16.msra.mxu0 0
        %1141 = vmatprep.mubr.bf16.mxu0 0
        %1142 = vmatmul.mubr.bf16.gmra.mxu0 %v1104
        %v1143 = vpop.f32.mrf.mxu0
        %v1144 = vadd.f32 0.0, %v1143
        %v1145 = vpop.f32.mrf.mxu0
        %v1146 = vpop.f32.mrf.mxu0
        %v1147 = vpop.f32.mrf.mxu0
        %1148 = vdwg.mxu0
        %v1149 = vadd.f32 %v1101, %v1144
        %v1150 = vld [vmem:[%s676] sm:$0xf]
        %v1152 = vsel %vm529, %v1150, 0
        %v1155 = vsel %vm533, %v1005, 0
        %1157 = vmatprep.subr.bf16.mxu0 0
        %1158 = vmatpush1.bf16.msra.mxu0 0
        %1159 = vmatprep.subr.bf16.mxu0 0
        %1160 = vmatpush1.bf16.msra.mxu0 0
        %1161 = vmatprep.subr.bf16.mxu0 0
        %1162 = vmatpush1.bf16.msra.mxu0 0
        %1163 = vmatprep.subr.bf16.mxu0 0
        %1164 = vmatpush1.bf16.msra.mxu0 0
        %1165 = vmatprep.subr.bf16.mxu0 0
        %1166 = vmatpush1.bf16.msra.mxu0 0
        %1167 = vmatprep.subr.bf16.mxu0 0
        %1168 = vmatpush1.bf16.msra.mxu0 0
        %1169 = vmatprep.subr.bf16.mxu0 0
        %1170 = vmatpush1.bf16.msra.mxu0 0
        %1171 = vmatprep.subr.bf16.mxu0 0
        %1172 = vmatpush1.bf16.msra.mxu0 %v1155
        %1173 = vmatprep.subr.bf16.mxu0 0
        %1174 = vmatpush2.bf16.msra.mxu0 0
        %1175 = vmatprep.subr.bf16.mxu0 0
        %1176 = vmatpush2.bf16.msra.mxu0 0
        %1177 = vmatprep.subr.bf16.mxu0 0
        %1178 = vmatpush2.bf16.msra.mxu0 0
        %1179 = vmatprep.subr.bf16.mxu0 0
        %1180 = vmatpush2.bf16.msra.mxu0 0
        %1181 = vmatprep.subr.bf16.mxu0 0
        %1182 = vmatpush2.bf16.msra.mxu0 0
        %1183 = vmatprep.subr.bf16.mxu0 0
        %1184 = vmatpush2.bf16.msra.mxu0 0
        %1185 = vmatprep.subr.bf16.mxu0 0
        %1186 = vmatpush2.bf16.msra.mxu0 0
        %1187 = vmatprep.subr.bf16.mxu0 0
        %1188 = vmatpush2.bf16.msra.mxu0 0
        %1189 = vmatprep.mubr.bf16.mxu0 0
        %1190 = vmatmul.mubr.bf16.gmra.mxu0 %v1152
        %v1191 = vpop.f32.mrf.mxu0
        %v1192 = vadd.f32 0.0, %v1191
        %v1193 = vpop.f32.mrf.mxu0
        %v1194 = vpop.f32.mrf.mxu0
        %v1195 = vpop.f32.mrf.mxu0
        %1196 = vdwg.mxu0
        %v1197 = vadd.f32 %v1149, %v1192
        %v1198 = vmax.f32 %v1197, 0.0
        %1199 = vst [vmem:[%s230 + $0x8] sm:$0xff] %v1198
        %s1200 = sand.u32 %s132, 1
        %s1201 = scalar_lea.sflag [#allocation4], %s1200
        %s1202 = sand.u32 %s132, 1
        %s1203 = smul.addr %s1202, 16
        %s1204 = scalar_lea.vmem [#allocation5], %s1203
        // Predicated region
        $region41: #{tpu_custom_call.1} parent=35 // pred_check
          %p1205 = pneg %p142
        $region42: #{tpu_custom_call.1} parent=35 // pred_check_branch
          %1207 = sbr.rel (%p1205) target = $region44
        $region43: #{tpu_custom_call.1} parent=35 // pred_region
          %s1208 = smul.u32 2, %s24
          %s1210 = ssub.s32 256, 256
          %1211 = vsyncadd %s1201, %s1210
          %s1212 = smul.addr %s23, 2
          %s1213 = sadd.s32 %s1208, %s1212
          %s1214 = smul.addr %s1213, 128
          %s1215 = scalar_lea.hbm %s4, %s1214
          %s1217 = sshll.u32 %s1204, 4
          %s1218 = int_to_ptr.vmem [resolvable:$true] %s1217
          %1220 = dma.vmem_to_hbm [thread:$0]  %s1218, 256, %s1215, %s1201
        $region44: #{tpu_custom_call.1} parent=35 // pred_fallthru
          _
      $region36: #{tpu_custom_call.1} parent=5 // pred_fallthru
        _
      %p1221 = scmp.le.s32.totalorder 2, %s14
      // Predicated region
      $region45: #{tpu_custom_call.1} parent=5 // pred_check
        %p1222 = pneg %p1221
      $region46: #{tpu_custom_call.1} parent=5 // pred_check_branch
        %1224 = sbr.rel (%p1222) target = $region48
      $region47: #{tpu_custom_call.1} parent=5 // pred_region
        %s1225 = ssub.s32 %s14, 2
        // Predicated region
        $region49: #{tpu_custom_call.1} parent=47 // pred_check
          %p1226 = pneg %p148
        $region50: #{tpu_custom_call.1} parent=47 // pred_check_branch
          %1228 = sbr.rel (%p1226) target = $region52
        $region51: #{tpu_custom_call.1} parent=47 // pred_region
          %s1229 = sand.u32 %s133, 1
          %s1230 = scalar_lea.sflag [#allocation4], %s1229
          %s1231 = sand.u32 %s133, 1
          %s1232 = smul.addr %s1231, 16
          %s1233 = scalar_lea.vmem [#allocation5], %s1232
          %1234 = dma.done %s1230, 256
        $region52: #{tpu_custom_call.1} parent=47 // pred_fallthru
          _
      $region48: #{tpu_custom_call.1} parent=5 // pred_fallthru
        _
    $region6: #{tpu_custom_call.1} parent=1 // loop_footer
      %s18 = sadd.s32 1, %s14
    $region7: #{tpu_custom_call.1} parent=1 // loop_footer_branch
      %13 = sbr.rel target = $region3
    $region8: #{tpu_custom_call.1} parent=1 // loop_exit
      _
    %1235 = vsyncpa [#allocation3], 1
    %s1236 = scalar_lea.sflag [#allocation3], 1
    %1237 = vsyncpa %s1236, 1
    %1238 = vsyncpa [#allocation4], 1
    %s1239 = scalar_lea.sflag [#allocation4], 1
    %1240 = vsyncpa %s1239, 1

</llo_original>
